<compile_context>
chip_gen: v7x
topology: tpu7x:2x2x1
jax: 0.10.0
libtpu: 0.0.40
codegen_flags: <defaults>
</compile_context>

<pallas_src>
import jax
import jax.numpy as jnp
from jax.experimental import pallas as pl
from jax.experimental.pallas import tpu as pltpu

LANE = 128  # TPU lane width


def _round_up(n, m):
    return ((n + m - 1) // m) * m


def sae_kernel(x_ref,
               w1_ref, b1_ref,
               w2_ref, b2_ref,
               w3_ref, b3_ref,
               w4_ref, b4_ref,
               o_ref):
    """Fused 4-layer MLP for one batch tile.

    Matmul operands are in the weights' dtype (bf16 on v6e/v7x); accumulation,
    bias add and activations are f32; output is f32. relu/sigmoid run on
    VPU/EUP and are hidden under the MXU work once the tile is large.
    """
    cdt = w1_ref.dtype                      # MXU operand dtype
    x = x_ref[...].astype(cdt)

    h = jnp.dot(x, w1_ref[...], preferred_element_type=jnp.float32) + b1_ref[...]
    h = jnp.maximum(h, 0.0).astype(cdt)

    h = jnp.dot(h, w2_ref[...], preferred_element_type=jnp.float32) + b2_ref[...]
    h = jnp.maximum(h, 0.0).astype(cdt)

    h = jnp.dot(h, w3_ref[...], preferred_element_type=jnp.float32) + b3_ref[...]
    h = jnp.maximum(h, 0.0).astype(cdt)

    logits = jnp.dot(h, w4_ref[...], preferred_element_type=jnp.float32) + b4_ref[...]
    o_ref[...] = 1.0 + 4.0 * jax.nn.sigmoid(logits)   # sigmoid -> EUP


def sparse_autoencoder_forward(x, params, *, batch_tile=256,
                               compute_dtype=jnp.bfloat16):
    """x: [B, num_items] float32.

    params: dict with w{1..4} stored pre-transposed as [in, out] and b{1..4}
    as [1, out], all float32. Returns float32 [B, num_items] in [1, 5].
    """
    B, num_items = x.shape
    w1, b1 = params["w1"], params["b1"]
    w2, b2 = params["w2"], params["b2"]
    w3, b3 = params["w3"], params["b3"]
    w4, b4 = params["w4"], params["b4"]
    hidden1 = w1.shape[1]
    latent = w2.shape[1]

    # ---- pad every feature dim to a lane multiple (128) -> lane-dense vregs ----
    n_p = _round_up(num_items, LANE)
    h1_p = _round_up(hidden1, LANE)
    lat_p = _round_up(latent, LANE)

    def pad2(a, rows, cols):
        return jnp.pad(a, ((0, rows - a.shape[0]), (0, cols - a.shape[1])))

    # ---- batch tiling: big MXU-friendly tile; small batches run as one tile ----
    bt = max(8, min(batch_tile, _round_up(B, 8)))
    B_p = _round_up(B, bt)                  # tail handled by zero-padding rows
    grid = B_p // bt

    x_p = pad2(x, B_p, n_p).astype(compute_dtype)

    w1_p = pad2(w1, n_p, h1_p).astype(compute_dtype)
    w2_p = pad2(w2, h1_p, lat_p).astype(compute_dtype)
    w3_p = pad2(w3, lat_p, h1_p).astype(compute_dtype)
    w4_p = pad2(w4, h1_p, n_p).astype(compute_dtype)
    b1_p = pad2(b1, 1, h1_p).astype(jnp.float32)
    b2_p = pad2(b2, 1, lat_p).astype(jnp.float32)
    b3_p = pad2(b3, 1, h1_p).astype(jnp.float32)
    b4_p = pad2(b4, 1, n_p).astype(jnp.float32)

    # Constant index_map => same block every grid step => weights/biases stay
    # resident in VMEM (no per-step re-DMA).
    def resident(a):
        return pl.BlockSpec(a.shape, lambda i: (0, 0))

    out_p = pl.pallas_call(
        sae_kernel,
        out_shape=jax.ShapeDtypeStruct((B_p, n_p), jnp.float32),
        grid=(grid,),
        in_specs=[
            pl.BlockSpec((bt, n_p), lambda i: (i, 0)),   # x batch tile
            resident(w1_p), resident(b1_p),
            resident(w2_p), resident(b2_p),
            resident(w3_p), resident(b3_p),
            resident(w4_p), resident(b4_p),
        ],
        out_specs=pl.BlockSpec((bt, n_p), lambda i: (i, 0)),
        compiler_params=pltpu.CompilerParams(
            dimension_semantics=("parallel",)),          # megacore-shardable
    )(x_p, w1_p, b1_p, w2_p, b2_p, w3_p, b3_p, w4_p, b4_p)

    return out_p[:B, :num_items]


def init_params(key, num_items, latent_dim):
    """Deterministic init mimicking nn.Linear's U(-1/sqrt(fan_in), 1/sqrt(fan_in)).
    Weights stored as [in, out] (transposed vs. PyTorch's [out, in])."""
    hidden1 = latent_dim * 2
    dims = [(num_items, hidden1), (hidden1, latent_dim),
            (latent_dim, hidden1), (hidden1, num_items)]
    params = {}
    keys = jax.random.split(key, 2 * len(dims))
    for n, (fan_in, fan_out) in enumerate(dims, start=1):
        bound = 1.0 / (fan_in ** 0.5)
        params[f"w{n}"] = jax.random.uniform(
            keys[2 * (n - 1)], (fan_in, fan_out), jnp.float32, -bound, bound)
        params[f"b{n}"] = jax.random.uniform(
            keys[2 * (n - 1) + 1], (1, fan_out), jnp.float32, -bound, bound)
    return params


def reference_forward(x, params, compute_dtype=jnp.float32):
    """Pure-JAX reference with the same operand-dtype / f32-accumulate recipe."""
    cdt = compute_dtype
    w = lambda n: params[f"w{n}"].astype(cdt)
    b = lambda n: params[f"b{n}"].astype(jnp.float32)
    h = x.astype(cdt)
    h = jnp.maximum(jnp.dot(h, w(1), preferred_element_type=jnp.float32) + b(1), 0.0).astype(cdt)
    h = jnp.maximum(jnp.dot(h, w(2), preferred_element_type=jnp.float32) + b(2), 0.0).astype(cdt)
    h = jnp.maximum(jnp.dot(h, w(3), preferred_element_type=jnp.float32) + b(3), 0.0).astype(cdt)
    logits = jnp.dot(h, w(4), preferred_element_type=jnp.float32) + b(4)
    return 1.0 + 4.0 * jax.nn.sigmoid(logits)


if __name__ == "__main__":
    # Small shapes consistent with the module: num_items features in/out,
    # latent_dim bottleneck, hidden1 = 2*latent_dim. latent_dim=64 exercises
    # the 64 -> 128 lane padding path inside the wrapper.
    batch = 16
    num_items = 512
    latent_dim = 64

    key = jax.random.PRNGKey(0)
    k_x, k_p = jax.random.split(key)
    x = jax.random.uniform(k_x, (batch, num_items), jnp.float32)  # ratings-like in [0,1)
    params = init_params(k_p, num_items, latent_dim)

    # Whole demo batch fits in one tile -> grid=(1,), no per-step overhead.
    y = sparse_autoencoder_forward(x, params, batch_tile=256)
    y = jax.block_until_ready(y)
    assert y.shape == (batch, num_items)

    # Tight check vs. a reference using the same bf16-operand / f32-accumulate math.
    y_ref_bf16 = reference_forward(x, params, compute_dtype=jnp.bfloat16)
    assert jnp.allclose(y, y_ref_bf16, atol=1e-3, rtol=1e-3)

    # Looser semantic check vs. the full-f32 (PyTorch-equivalent) math.
    y_ref_f32 = reference_forward(x, params, compute_dtype=jnp.float32)
    assert jnp.allclose(y, y_ref_f32, atol=0.1, rtol=0.0)

    # Output range of 1 + 4*sigmoid(.)
    assert bool(jnp.all(y >= 1.0)) and bool(jnp.all(y <= 5.0))

    print("KERNEL_OK")
</pallas_src>

<mosaic_0001>
module attributes {stable_mosaic.version = 11 : i64} {
  func.func @sae_kernel(%arg0: i32, %arg1: memref<16x512xbf16, #tpu.memory_space<vmem>>, %arg2: memref<512x128xbf16, #tpu.memory_space<vmem>>, %arg3: memref<1x128xf32, #tpu.memory_space<vmem>>, %arg4: memref<128x128xbf16, #tpu.memory_space<vmem>>, %arg5: memref<1x128xf32, #tpu.memory_space<vmem>>, %arg6: memref<128x128xbf16, #tpu.memory_space<vmem>>, %arg7: memref<1x128xf32, #tpu.memory_space<vmem>>, %arg8: memref<128x512xbf16, #tpu.memory_space<vmem>>, %arg9: memref<1x512xf32, #tpu.memory_space<vmem>>, %arg10: memref<16x512xf32, #tpu.memory_space<vmem>>) attributes {dimension_semantics = [#tpu.dimension_semantics<parallel>], iteration_bounds = array<i64: 1>, scalar_prefetch = 0 : i64, scratch_operands = 0 : i64, tpu.core_type = #tpu.core_type<tc>, window_params = [{transform_indices = @transform_0, window_bounds = array<i64: 16, 512>}, {pipeline_mode = #tpu.pipeline_mode<synchronous>, transform_indices = @transform_1, window_bounds = array<i64: 512, 128>}, {pipeline_mode = #tpu.pipeline_mode<synchronous>, transform_indices = @transform_2, window_bounds = array<i64: 1, 128>}, {pipeline_mode = #tpu.pipeline_mode<synchronous>, transform_indices = @transform_3, window_bounds = array<i64: 128, 128>}, {pipeline_mode = #tpu.pipeline_mode<synchronous>, transform_indices = @transform_4, window_bounds = array<i64: 1, 128>}, {pipeline_mode = #tpu.pipeline_mode<synchronous>, transform_indices = @transform_5, window_bounds = array<i64: 128, 128>}, {pipeline_mode = #tpu.pipeline_mode<synchronous>, transform_indices = @transform_6, window_bounds = array<i64: 1, 128>}, {pipeline_mode = #tpu.pipeline_mode<synchronous>, transform_indices = @transform_7, window_bounds = array<i64: 128, 512>}, {pipeline_mode = #tpu.pipeline_mode<synchronous>, transform_indices = @transform_8, window_bounds = array<i64: 1, 512>}, {transform_indices = @transform_9, window_bounds = array<i64: 16, 512>}]} {
    %c0 = arith.constant 0 : index
    %c0_0 = arith.constant 0 : index
    %0 = vector.load %arg1[%c0, %c0_0] : memref<16x512xbf16, #tpu.memory_space<vmem>>, vector<16x512xbf16>
    %c0_1 = arith.constant 0 : index
    %c0_2 = arith.constant 0 : index
    %1 = vector.load %arg2[%c0_1, %c0_2] : memref<512x128xbf16, #tpu.memory_space<vmem>>, vector<512x128xbf16>
    %cst = arith.constant dense<0.000000e+00> : vector<16x128xf32>
    %2 = tpu.matmul %0, %1, %cst {dimension_numbers = #tpu.dot_dimension_numbers<[1], [0], [0], [1], [0, 0, 1, 1], [], []>} : vector<16x512xbf16>, vector<512x128xbf16>, vector<16x128xf32> -> vector<16x128xf32>
    %c0_3 = arith.constant 0 : index
    %c0_4 = arith.constant 0 : index
    %3 = vector.load %arg3[%c0_3, %c0_4] : memref<1x128xf32, #tpu.memory_space<vmem>>, vector<1x128xf32>
    %4 = vector.broadcast %3 : vector<1x128xf32> to vector<16x128xf32>
    %5 = arith.addf %2, %4 : vector<16x128xf32>
    %cst_5 = arith.constant 0.000000e+00 : f32
    %6 = vector.broadcast %cst_5 : f32 to vector<16x128xf32>
    %7 = arith.maximumf %5, %6 : vector<16x128xf32>
    %8 = arith.truncf %7 : vector<16x128xf32> to vector<16x128xbf16>
    %c0_6 = arith.constant 0 : index
    %c0_7 = arith.constant 0 : index
    %9 = vector.load %arg4[%c0_6, %c0_7] : memref<128x128xbf16, #tpu.memory_space<vmem>>, vector<128x128xbf16>
    %cst_8 = arith.constant dense<0.000000e+00> : vector<16x128xf32>
    %10 = tpu.matmul %8, %9, %cst_8 {dimension_numbers = #tpu.dot_dimension_numbers<[1], [0], [0], [1], [0, 0, 1, 1], [], []>} : vector<16x128xbf16>, vector<128x128xbf16>, vector<16x128xf32> -> vector<16x128xf32>
    %c0_9 = arith.constant 0 : index
    %c0_10 = arith.constant 0 : index
    %11 = vector.load %arg5[%c0_9, %c0_10] : memref<1x128xf32, #tpu.memory_space<vmem>>, vector<1x128xf32>
    %12 = vector.broadcast %11 : vector<1x128xf32> to vector<16x128xf32>
    %13 = arith.addf %10, %12 : vector<16x128xf32>
    %cst_11 = arith.constant 0.000000e+00 : f32
    %14 = vector.broadcast %cst_11 : f32 to vector<16x128xf32>
    %15 = arith.maximumf %13, %14 : vector<16x128xf32>
    %16 = arith.truncf %15 : vector<16x128xf32> to vector<16x128xbf16>
    %c0_12 = arith.constant 0 : index
    %c0_13 = arith.constant 0 : index
    %17 = vector.load %arg6[%c0_12, %c0_13] : memref<128x128xbf16, #tpu.memory_space<vmem>>, vector<128x128xbf16>
    %cst_14 = arith.constant dense<0.000000e+00> : vector<16x128xf32>
    %18 = tpu.matmul %16, %17, %cst_14 {dimension_numbers = #tpu.dot_dimension_numbers<[1], [0], [0], [1], [0, 0, 1, 1], [], []>} : vector<16x128xbf16>, vector<128x128xbf16>, vector<16x128xf32> -> vector<16x128xf32>
    %c0_15 = arith.constant 0 : index
    %c0_16 = arith.constant 0 : index
    %19 = vector.load %arg7[%c0_15, %c0_16] : memref<1x128xf32, #tpu.memory_space<vmem>>, vector<1x128xf32>
    %20 = vector.broadcast %19 : vector<1x128xf32> to vector<16x128xf32>
    %21 = arith.addf %18, %20 : vector<16x128xf32>
    %cst_17 = arith.constant 0.000000e+00 : f32
    %22 = vector.broadcast %cst_17 : f32 to vector<16x128xf32>
    %23 = arith.maximumf %21, %22 : vector<16x128xf32>
    %24 = arith.truncf %23 : vector<16x128xf32> to vector<16x128xbf16>
    %c0_18 = arith.constant 0 : index
    %c0_19 = arith.constant 0 : index
    %25 = vector.load %arg8[%c0_18, %c0_19] : memref<128x512xbf16, #tpu.memory_space<vmem>>, vector<128x512xbf16>
    %cst_20 = arith.constant dense<0.000000e+00> : vector<16x512xf32>
    %26 = tpu.matmul %24, %25, %cst_20 {dimension_numbers = #tpu.dot_dimension_numbers<[1], [0], [0], [1], [0, 0, 1, 1], [], []>} : vector<16x128xbf16>, vector<128x512xbf16>, vector<16x512xf32> -> vector<16x512xf32>
    %c0_21 = arith.constant 0 : index
    %c0_22 = arith.constant 0 : index
    %27 = vector.load %arg9[%c0_21, %c0_22] : memref<1x512xf32, #tpu.memory_space<vmem>>, vector<1x512xf32>
    %28 = vector.broadcast %27 : vector<1x512xf32> to vector<16x512xf32>
    %29 = arith.addf %26, %28 : vector<16x512xf32>
    %30 = arith.negf %29 : vector<16x512xf32>
    %31 = math.exp %30 : vector<16x512xf32>
    %cst_23 = arith.constant 1.000000e+00 : f32
    %32 = vector.broadcast %cst_23 : f32 to vector<16x512xf32>
    %33 = arith.addf %32, %31 : vector<16x512xf32>
    %34 = arith.divf %32, %33 : vector<16x512xf32>
    %cst_24 = arith.constant 4.000000e+00 : f32
    %35 = vector.broadcast %cst_24 : f32 to vector<16x512xf32>
    %36 = arith.mulf %35, %34 : vector<16x512xf32>
    %cst_25 = arith.constant 1.000000e+00 : f32
    %37 = vector.broadcast %cst_25 : f32 to vector<16x512xf32>
    %38 = arith.addf %37, %36 : vector<16x512xf32>
    %c0_26 = arith.constant 0 : index
    %c0_27 = arith.constant 0 : index
    %39 = vector.load %arg10[%c0_26, %c0_27] : memref<16x512xf32, #tpu.memory_space<vmem>>, vector<16x512xf32>
    tpu.vector_store %arg10[%c0_26, %c0_27], %38 {strides = array<i32>} : memref<16x512xf32, #tpu.memory_space<vmem>>, vector<16x512xf32>,
    return
  }
  func.func @transform_0(%arg0: i32) -> (i32, i32) {
    %c0_i32 = arith.constant 0 : i32
    %c0_i32_0 = arith.constant 0 : i32
    return %arg0, %c0_i32 : i32, i32
  }
  func.func @transform_1(%arg0: i32) -> (i32, i32) {
    %c0_i32 = arith.constant 0 : i32
    %c0_i32_0 = arith.constant 0 : i32
    %c0_i32_1 = arith.constant 0 : i32
    return %c0_i32, %c0_i32_0 : i32, i32
  }
  func.func @transform_2(%arg0: i32) -> (i32, i32) {
    %c0_i32 = arith.constant 0 : i32
    %c0_i32_0 = arith.constant 0 : i32
    %c0_i32_1 = arith.constant 0 : i32
    return %c0_i32, %c0_i32_0 : i32, i32
  }
  func.func @transform_3(%arg0: i32) -> (i32, i32) {
    %c0_i32 = arith.constant 0 : i32
    %c0_i32_0 = arith.constant 0 : i32
    %c0_i32_1 = arith.constant 0 : i32
    return %c0_i32, %c0_i32_0 : i32, i32
  }
  func.func @transform_4(%arg0: i32) -> (i32, i32) {
    %c0_i32 = arith.constant 0 : i32
    %c0_i32_0 = arith.constant 0 : i32
    %c0_i32_1 = arith.constant 0 : i32
    return %c0_i32, %c0_i32_0 : i32, i32
  }
  func.func @transform_5(%arg0: i32) -> (i32, i32) {
    %c0_i32 = arith.constant 0 : i32
    %c0_i32_0 = arith.constant 0 : i32
    %c0_i32_1 = arith.constant 0 : i32
    return %c0_i32, %c0_i32_0 : i32, i32
  }
  func.func @transform_6(%arg0: i32) -> (i32, i32) {
    %c0_i32 = arith.constant 0 : i32
    %c0_i32_0 = arith.constant 0 : i32
    %c0_i32_1 = arith.constant 0 : i32
    return %c0_i32, %c0_i32_0 : i32, i32
  }
  func.func @transform_7(%arg0: i32) -> (i32, i32) {
    %c0_i32 = arith.constant 0 : i32
    %c0_i32_0 = arith.constant 0 : i32
    %c0_i32_1 = arith.constant 0 : i32
    return %c0_i32, %c0_i32_0 : i32, i32
  }
  func.func @transform_8(%arg0: i32) -> (i32, i32) {
    %c0_i32 = arith.constant 0 : i32
    %c0_i32_0 = arith.constant 0 : i32
    %c0_i32_1 = arith.constant 0 : i32
    return %c0_i32, %c0_i32_0 : i32, i32
  }
  func.func @transform_9(%arg0: i32) -> (i32, i32) {
    %c0_i32 = arith.constant 0 : i32
    %c0_i32_0 = arith.constant 0 : i32
    return %arg0, %c0_i32 : i32, i32
  }
}

</mosaic_0001>

<llo_original>
// kernel: tpu_custom_call.1
$region0: #{tpu_custom_call.1}
  #allocation0 [shape = 'u32[]', space=smem, size = 0x4, offset = 0x4, fixed_abs, tag = 'smem constant byte address 0x4 - core index']
  #allocation1 [shape = 'u32[144,128]{1,0:T(1,128)}', space=vmem, size = 0x12000, scoped, tag = 'internal scratch']
  %s0 = inlined_call_operand.hbm [shape: bf16[16,512], index: 0, kind: input, shape index: {}]
  %s1 = inlined_call_operand.hbm [shape: bf16[512,128], index: 1, kind: input, shape index: {}]
  %s2 = inlined_call_operand.vmem [shape: f32[1,128], index: 2, kind: input, shape index: {}]
  %s3 = inlined_call_operand.hbm [shape: bf16[128,128], index: 3, kind: input, shape index: {}]
  %s4 = inlined_call_operand.vmem [shape: f32[1,128], index: 4, kind: input, shape index: {}]
  %s5 = inlined_call_operand.hbm [shape: bf16[128,128], index: 5, kind: input, shape index: {}]
  %s6 = inlined_call_operand.vmem [shape: f32[1,128], index: 6, kind: input, shape index: {}]
  %s7 = inlined_call_operand.hbm [shape: bf16[128,512], index: 7, kind: input, shape index: {}]
  %s8 = inlined_call_operand.vmem [shape: f32[1,512], index: 8, kind: input, shape index: {}]
  %s9 = inlined_call_operand.hbm [shape: f32[16,512], index: 9, kind: output, shape index: {}]
  %s10 = sld [smem:[#allocation0]]
  $region66: #{tpu_custom_call.1} parent=0
    _
  %s12 = ssub.s32 1, %s10
  %s13 = scalar_select 0, %s12, %s10
  $region1: #{tpu_custom_call.1} parent=0
    #allocation2 [shape = 'u8[16384]{0}', space=vmem, size = 0x4000, scoped, tag = 'input window, operand 0, single buffered']
    #allocation3 [shape = 's32[1]{0}', space=sflag, size = 0x4, scoped, tag = 'scoped memory for tpu_custom_call.1']
    #allocation4 [shape = 's32[1]{0}', space=sflag, size = 0x4, scoped, tag = 'scoped memory for tpu_custom_call.1']
    #allocation5 [shape = 'u8[131072]{0}', space=vmem, size = 0x20000, scoped, tag = 'input window, operand 1, single buffered']
    #allocation6 [shape = 's32[1]{0}', space=sflag, size = 0x4, scoped, tag = 'scoped memory for tpu_custom_call.1']
    #allocation7 [shape = 'u8[32768]{0}', space=vmem, size = 0x8000, scoped, tag = 'input window, operand 3, single buffered']
    #allocation8 [shape = 'u8[32768]{0}', space=vmem, size = 0x8000, scoped, tag = 'input window, operand 5, single buffered']
    #allocation9 [shape = 's32[1]{0}', space=sflag, size = 0x4, scoped, tag = 'scoped memory for tpu_custom_call.1']
    #allocation10 [shape = 'u8[131072]{0}', space=vmem, size = 0x20000, scoped, tag = 'input window, operand 7, single buffered']
    #allocation11 [shape = 'u8[32768]{0}', space=vmem, size = 0x8000, scoped, tag = 'output window, operand 0, single buffered']
    %14 = vsyncpa [#allocation3], 0
    %15 = vsyncpa [#allocation6], 0
    %16 = vsyncpa [#allocation9], 0
    %17 = vsyncpa [#allocation4], 0
    // Predicated region
    $region2: #{tpu_custom_call.1} parent=1 // pred_check
      _
    $region3: #{tpu_custom_call.1} parent=1 // pred_check_branch
      %19 = sbr.rel (0) target = $region5
    $region4: #{tpu_custom_call.1} parent=1 // pred_region
      %s21 = ssub.s32 512, 512
      %22 = vsyncadd [#allocation3], %s21
      %s23 = sshll.u32 [#allocation2], 4
      %s24 = int_to_ptr.vmem [resolvable:$true] %s23
      %29 = dma.hbm_to_vmem [thread:$0]  %s0, 512, %s24, [#allocation3], 256, 256, 16
    $region5: #{tpu_custom_call.1} parent=1 // pred_fallthru
      _
    // Predicated region
    $region6: #{tpu_custom_call.1} parent=1 // pred_check
      _
    $region7: #{tpu_custom_call.1} parent=1 // pred_check_branch
      %31 = sbr.rel (0) target = $region9
    $region8: #{tpu_custom_call.1} parent=1 // pred_region
      %s33 = ssub.s32 4096, 4096
      %34 = vsyncadd [#allocation6], %s33
      %s35 = sshll.u32 [#allocation5], 4
      %s36 = int_to_ptr.vmem [resolvable:$true] %s35
      %41 = dma.hbm_to_vmem [thread:$0]  %s1, 4096, %s36, [#allocation6], 64, 64, 4
    $region9: #{tpu_custom_call.1} parent=1 // pred_fallthru
      _
    // Predicated region
    $region10: #{tpu_custom_call.1} parent=1 // pred_check
      _
    $region11: #{tpu_custom_call.1} parent=1 // pred_check_branch
      %43 = sbr.rel (0) target = $region13
    $region12: #{tpu_custom_call.1} parent=1 // pred_region
      _
    $region13: #{tpu_custom_call.1} parent=1 // pred_fallthru
      _
    // Predicated region
    $region14: #{tpu_custom_call.1} parent=1 // pred_check
      _
    $region15: #{tpu_custom_call.1} parent=1 // pred_check_branch
      %45 = sbr.rel (0) target = $region17
    $region16: #{tpu_custom_call.1} parent=1 // pred_region
      %s47 = ssub.s32 1024, 1024
      %48 = vsyncadd [#allocation6], %s47
      %s49 = sshll.u32 [#allocation7], 4
      %s50 = int_to_ptr.vmem [resolvable:$true] %s49
      %55 = dma.hbm_to_vmem [thread:$0]  %s3, 1024, %s50, [#allocation6], 64, 64, 4
    $region17: #{tpu_custom_call.1} parent=1 // pred_fallthru
      _
    // Predicated region
    $region18: #{tpu_custom_call.1} parent=1 // pred_check
      _
    $region19: #{tpu_custom_call.1} parent=1 // pred_check_branch
      %57 = sbr.rel (0) target = $region21
    $region20: #{tpu_custom_call.1} parent=1 // pred_region
      _
    $region21: #{tpu_custom_call.1} parent=1 // pred_fallthru
      _
    // Predicated region
    $region22: #{tpu_custom_call.1} parent=1 // pred_check
      _
    $region23: #{tpu_custom_call.1} parent=1 // pred_check_branch
      %59 = sbr.rel (0) target = $region25
    $region24: #{tpu_custom_call.1} parent=1 // pred_region
      %s61 = ssub.s32 1024, 1024
      %62 = vsyncadd [#allocation9], %s61
      %s63 = sshll.u32 [#allocation8], 4
      %s64 = int_to_ptr.vmem [resolvable:$true] %s63
      %69 = dma.hbm_to_vmem [thread:$0]  %s5, 1024, %s64, [#allocation9], 64, 64, 4
    $region25: #{tpu_custom_call.1} parent=1 // pred_fallthru
      _
    // Predicated region
    $region26: #{tpu_custom_call.1} parent=1 // pred_check
      _
    $region27: #{tpu_custom_call.1} parent=1 // pred_check_branch
      %71 = sbr.rel (0) target = $region29
    $region28: #{tpu_custom_call.1} parent=1 // pred_region
      _
    $region29: #{tpu_custom_call.1} parent=1 // pred_fallthru
      _
    // Predicated region
    $region30: #{tpu_custom_call.1} parent=1 // pred_check
      _
    $region31: #{tpu_custom_call.1} parent=1 // pred_check_branch
      %73 = sbr.rel (0) target = $region33
    $region32: #{tpu_custom_call.1} parent=1 // pred_region
      %s75 = ssub.s32 4096, 4096
      %76 = vsyncadd [#allocation9], %s75
      %s77 = sshll.u32 [#allocation10], 4
      %s78 = int_to_ptr.vmem [resolvable:$true] %s77
      %83 = dma.hbm_to_vmem [thread:$0]  %s7, 4096, %s78, [#allocation9], 256, 256, 16
    $region33: #{tpu_custom_call.1} parent=1 // pred_fallthru
      _
    // Predicated region
    $region34: #{tpu_custom_call.1} parent=1 // pred_check
      _
    $region35: #{tpu_custom_call.1} parent=1 // pred_check_branch
      %85 = sbr.rel (0) target = $region37
    $region36: #{tpu_custom_call.1} parent=1 // pred_region
      _
    $region37: #{tpu_custom_call.1} parent=1 // pred_fallthru
      _
    // Predicated region
    $region38: #{tpu_custom_call.1} parent=1 // pred_check
      _
    $region39: #{tpu_custom_call.1} parent=1 // pred_check_branch
      %87 = sbr.rel (0) target = $region41
    $region40: #{tpu_custom_call.1} parent=1 // pred_region
      %88 = dma.done [#allocation3], 512
    $region41: #{tpu_custom_call.1} parent=1 // pred_fallthru
      _
    // Predicated region
    $region42: #{tpu_custom_call.1} parent=1 // pred_check
      _
    $region43: #{tpu_custom_call.1} parent=1 // pred_check_branch
      %90 = sbr.rel (0) target = $region45
    $region44: #{tpu_custom_call.1} parent=1 // pred_region
      %91 = dma.done [#allocation6], 4096
    $region45: #{tpu_custom_call.1} parent=1 // pred_fallthru
      _
    // Predicated region
    $region46: #{tpu_custom_call.1} parent=1 // pred_check
      _
    $region47: #{tpu_custom_call.1} parent=1 // pred_check_branch
      %93 = sbr.rel (0) target = $region49
    $region48: #{tpu_custom_call.1} parent=1 // pred_region
      %94 = dma.done [#allocation6], 1024
    $region49: #{tpu_custom_call.1} parent=1 // pred_fallthru
      _
    // Predicated region
    $region50: #{tpu_custom_call.1} parent=1 // pred_check
      _
    $region51: #{tpu_custom_call.1} parent=1 // pred_check_branch
      %96 = sbr.rel (0) target = $region53
    $region52: #{tpu_custom_call.1} parent=1 // pred_region
      %97 = dma.done [#allocation9], 1024
    $region53: #{tpu_custom_call.1} parent=1 // pred_fallthru
      _
    // Predicated region
    $region54: #{tpu_custom_call.1} parent=1 // pred_check
      _
    $region55: #{tpu_custom_call.1} parent=1 // pred_check_branch
      %99 = sbr.rel (0) target = $region57
    $region56: #{tpu_custom_call.1} parent=1 // pred_region
      %100 = dma.done [#allocation9], 4096
    $region57: #{tpu_custom_call.1} parent=1 // pred_fallthru
      _
    %v102 = vld [vmem:[#allocation2] sm:$0xff]
    %v103 = vld [vmem:[#allocation2 + $0x8] sm:$0xff]
    %v104 = vld [vmem:[#allocation2 + $0x10] sm:$0xff]
    %v105 = vld [vmem:[#allocation2 + $0x18] sm:$0xff]
    %v106 = vld [vmem:[#allocation5] sm:$0xf]
    %v107 = vld [vmem:[#allocation5 + $0x4] sm:$0xf]
    %v108 = vld [vmem:[#allocation5 + $0x8] sm:$0xf]
    %v109 = vld [vmem:[#allocation5 + $0xc] sm:$0xf]
    %v110 = vld [vmem:[#allocation5 + $0x10] sm:$0xf]
    %v111 = vld [vmem:[#allocation5 + $0x14] sm:$0xf]
    %v112 = vld [vmem:[#allocation5 + $0x18] sm:$0xf]
    %v113 = vld [vmem:[#allocation5 + $0x1c] sm:$0xf]
    %v114 = vld [vmem:[#allocation5 + $0x20] sm:$0xf]
    %v115 = vld [vmem:[#allocation5 + $0x24] sm:$0xf]
    %v116 = vld [vmem:[#allocation5 + $0x28] sm:$0xf]
    %v117 = vld [vmem:[#allocation5 + $0x2c] sm:$0xf]
    %v118 = vld [vmem:[#allocation5 + $0x30] sm:$0xf]
    %v119 = vld [vmem:[#allocation5 + $0x34] sm:$0xf]
    %v120 = vld [vmem:[#allocation5 + $0x38] sm:$0xf]
    %v121 = vld [vmem:[#allocation5 + $0x3c] sm:$0xf]
    %v122 = vld [vmem:[#allocation5 + $0x40] sm:$0xf]
    %v123 = vld [vmem:[#allocation5 + $0x44] sm:$0xf]
    %v124 = vld [vmem:[#allocation5 + $0x48] sm:$0xf]
    %v125 = vld [vmem:[#allocation5 + $0x4c] sm:$0xf]
    %v126 = vld [vmem:[#allocation5 + $0x50] sm:$0xf]
    %v127 = vld [vmem:[#allocation5 + $0x54] sm:$0xf]
    %v128 = vld [vmem:[#allocation5 + $0x58] sm:$0xf]
    %v129 = vld [vmem:[#allocation5 + $0x5c] sm:$0xf]
    %v130 = vld [vmem:[#allocation5 + $0x60] sm:$0xf]
    %v131 = vld [vmem:[#allocation5 + $0x64] sm:$0xf]
    %v132 = vld [vmem:[#allocation5 + $0x68] sm:$0xf]
    %v133 = vld [vmem:[#allocation5 + $0x6c] sm:$0xf]
    %v134 = vld [vmem:[#allocation5 + $0x70] sm:$0xf]
    %v135 = vld [vmem:[#allocation5 + $0x74] sm:$0xf]
    %v136 = vld [vmem:[#allocation5 + $0x78] sm:$0xf]
    %v137 = vld [vmem:[#allocation5 + $0x7c] sm:$0xf]
    %v138 = vld [vmem:[#allocation5 + $0x80] sm:$0xf]
    %v139 = vld [vmem:[#allocation5 + $0x84] sm:$0xf]
    %v140 = vld [vmem:[#allocation5 + $0x88] sm:$0xf]
    %v141 = vld [vmem:[#allocation5 + $0x8c] sm:$0xf]
    %v142 = vld [vmem:[#allocation5 + $0x90] sm:$0xf]
    %v143 = vld [vmem:[#allocation5 + $0x94] sm:$0xf]
    %v144 = vld [vmem:[#allocation5 + $0x98] sm:$0xf]
    %v145 = vld [vmem:[#allocation5 + $0x9c] sm:$0xf]
    %v146 = vld [vmem:[#allocation5 + $0xa0] sm:$0xf]
    %v147 = vld [vmem:[#allocation5 + $0xa4] sm:$0xf]
    %v148 = vld [vmem:[#allocation5 + $0xa8] sm:$0xf]
    %v149 = vld [vmem:[#allocation5 + $0xac] sm:$0xf]
    %v150 = vld [vmem:[#allocation5 + $0xb0] sm:$0xf]
    %v151 = vld [vmem:[#allocation5 + $0xb4] sm:$0xf]
    %v152 = vld [vmem:[#allocation5 + $0xb8] sm:$0xf]
    %v153 = vld [vmem:[#allocation5 + $0xbc] sm:$0xf]
    %v154 = vld [vmem:[#allocation5 + $0xc0] sm:$0xf]
    %v155 = vld [vmem:[#allocation5 + $0xc4] sm:$0xf]
    %v156 = vld [vmem:[#allocation5 + $0xc8] sm:$0xf]
    %v157 = vld [vmem:[#allocation5 + $0xcc] sm:$0xf]
    %v158 = vld [vmem:[#allocation5 + $0xd0] sm:$0xf]
    %v159 = vld [vmem:[#allocation5 + $0xd4] sm:$0xf]
    %v160 = vld [vmem:[#allocation5 + $0xd8] sm:$0xf]
    %v161 = vld [vmem:[#allocation5 + $0xdc] sm:$0xf]
    %v162 = vld [vmem:[#allocation5 + $0xe0] sm:$0xf]
    %v163 = vld [vmem:[#allocation5 + $0xe4] sm:$0xf]
    %v164 = vld [vmem:[#allocation5 + $0xe8] sm:$0xf]
    %v165 = vld [vmem:[#allocation5 + $0xec] sm:$0xf]
    %v166 = vld [vmem:[#allocation5 + $0xf0] sm:$0xf]
    %v167 = vld [vmem:[#allocation5 + $0xf4] sm:$0xf]
    %v168 = vld [vmem:[#allocation5 + $0xf8] sm:$0xf]
    %v169 = vld [vmem:[#allocation5 + $0xfc] sm:$0xf]
    %v170 = vld [vmem:[%s2] sm:$0x1]
    %v172 = vlaneseq
    %v173 = vshrl.u32 %v172, 7
    %v174 = vsub.s32 0, %v173
    %v175 = vrot.slane %v170, %v174
    %v181 = vunpack.c.l.b16 %v102
    %v182 = vunpack.c.h.b16 %v102
    %v183 = vunpack.c.l.b16 %v103
    %v184 = vunpack.c.h.b16 %v103
    %v185 = vunpack.c.l.b16 %v104
    %v186 = vunpack.c.h.b16 %v104
    %v187 = vunpack.c.l.b16 %v105
    %v188 = vunpack.c.h.b16 %v105
    %v189 = vpack.c.b16 %v185, %v181
    %v190 = vpack.c.b16 %v186, %v182
    %v191 = vpack.c.b16 %v187, %v183
    %v192 = vpack.c.b16 %v188, %v184
    %v261 = vunpack.c.l.b16 %v106
    %v262 = vunpack.c.l.b16 %v107
    %v263 = vunpack.c.l.b16 %v108
    %v264 = vunpack.c.l.b16 %v109
    %v265 = vunpack.c.l.b16 %v110
    %v266 = vunpack.c.l.b16 %v111
    %v267 = vunpack.c.l.b16 %v112
    %v268 = vunpack.c.l.b16 %v113
    %v269 = vunpack.c.l.b16 %v114
    %v270 = vunpack.c.l.b16 %v115
    %v271 = vunpack.c.l.b16 %v116
    %v272 = vunpack.c.l.b16 %v117
    %v273 = vunpack.c.l.b16 %v118
    %v274 = vunpack.c.l.b16 %v119
    %v275 = vunpack.c.l.b16 %v120
    %v276 = vunpack.c.l.b16 %v121
    %v277 = vunpack.c.l.b16 %v122
    %v278 = vunpack.c.l.b16 %v123
    %v279 = vunpack.c.l.b16 %v124
    %v280 = vunpack.c.l.b16 %v125
    %v281 = vunpack.c.l.b16 %v126
    %v282 = vunpack.c.l.b16 %v127
    %v283 = vunpack.c.l.b16 %v128
    %v284 = vunpack.c.l.b16 %v129
    %v285 = vunpack.c.l.b16 %v130
    %v286 = vunpack.c.l.b16 %v131
    %v287 = vunpack.c.l.b16 %v132
    %v288 = vunpack.c.l.b16 %v133
    %v289 = vunpack.c.l.b16 %v134
    %v290 = vunpack.c.l.b16 %v135
    %v291 = vunpack.c.l.b16 %v136
    %v292 = vunpack.c.l.b16 %v137
    %v293 = vunpack.c.l.b16 %v138
    %v294 = vunpack.c.l.b16 %v139
    %v295 = vunpack.c.l.b16 %v140
    %v296 = vunpack.c.l.b16 %v141
    %v297 = vunpack.c.l.b16 %v142
    %v298 = vunpack.c.l.b16 %v143
    %v299 = vunpack.c.l.b16 %v144
    %v300 = vunpack.c.l.b16 %v145
    %v301 = vunpack.c.l.b16 %v146
    %v302 = vunpack.c.l.b16 %v147
    %v303 = vunpack.c.l.b16 %v148
    %v304 = vunpack.c.l.b16 %v149
    %v305 = vunpack.c.l.b16 %v150
    %v306 = vunpack.c.l.b16 %v151
    %v307 = vunpack.c.l.b16 %v152
    %v308 = vunpack.c.l.b16 %v153
    %v309 = vunpack.c.l.b16 %v154
    %v310 = vunpack.c.l.b16 %v155
    %v311 = vunpack.c.l.b16 %v156
    %v312 = vunpack.c.l.b16 %v157
    %v313 = vunpack.c.l.b16 %v158
    %v314 = vunpack.c.l.b16 %v159
    %v315 = vunpack.c.l.b16 %v160
    %v316 = vunpack.c.l.b16 %v161
    %v317 = vunpack.c.l.b16 %v162
    %v318 = vunpack.c.l.b16 %v163
    %v319 = vunpack.c.l.b16 %v164
    %v320 = vunpack.c.l.b16 %v165
    %v321 = vunpack.c.l.b16 %v166
    %v322 = vunpack.c.l.b16 %v167
    %v323 = vunpack.c.l.b16 %v168
    %v324 = vunpack.c.l.b16 %v169
    %v325 = vpack.c.b16 %v262, %v261
    %v326 = vpack.c.b16 %v264, %v263
    %v327 = vpack.c.b16 %v266, %v265
    %v328 = vpack.c.b16 %v268, %v267
    %v329 = vpack.c.b16 %v270, %v269
    %v330 = vpack.c.b16 %v272, %v271
    %v331 = vpack.c.b16 %v274, %v273
    %v332 = vpack.c.b16 %v276, %v275
    %v333 = vpack.c.b16 %v278, %v277
    %v334 = vpack.c.b16 %v280, %v279
    %v335 = vpack.c.b16 %v282, %v281
    %v336 = vpack.c.b16 %v284, %v283
    %v337 = vpack.c.b16 %v286, %v285
    %v338 = vpack.c.b16 %v288, %v287
    %v339 = vpack.c.b16 %v290, %v289
    %v340 = vpack.c.b16 %v292, %v291
    %v341 = vpack.c.b16 %v294, %v293
    %v342 = vpack.c.b16 %v296, %v295
    %v343 = vpack.c.b16 %v298, %v297
    %v344 = vpack.c.b16 %v300, %v299
    %v345 = vpack.c.b16 %v302, %v301
    %v346 = vpack.c.b16 %v304, %v303
    %v347 = vpack.c.b16 %v306, %v305
    %v348 = vpack.c.b16 %v308, %v307
    %v349 = vpack.c.b16 %v310, %v309
    %v350 = vpack.c.b16 %v312, %v311
    %v351 = vpack.c.b16 %v314, %v313
    %v352 = vpack.c.b16 %v316, %v315
    %v353 = vpack.c.b16 %v318, %v317
    %v354 = vpack.c.b16 %v320, %v319
    %v355 = vpack.c.b16 %v322, %v321
    %v356 = vpack.c.b16 %v324, %v323
    %389 = vmatprep.subr.bf16.mxu0 0
    %390 = vmatpush1.bf16.msra.mxu0 %v325
    %391 = vmatprep.subr.bf16.mxu0 0
    %392 = vmatpush1.bf16.msra.mxu0 %v326
    %393 = vmatprep.subr.bf16.mxu0 0
    %394 = vmatpush1.bf16.msra.mxu0 %v327
    %395 = vmatprep.subr.bf16.mxu0 0
    %396 = vmatpush1.bf16.msra.mxu0 %v328
    %397 = vmatprep.subr.bf16.mxu0 0
    %398 = vmatpush1.bf16.msra.mxu0 %v329
    %399 = vmatprep.subr.bf16.mxu0 0
    %400 = vmatpush1.bf16.msra.mxu0 %v330
    %401 = vmatprep.subr.bf16.mxu0 0
    %402 = vmatpush1.bf16.msra.mxu0 %v331
    %403 = vmatprep.subr.bf16.mxu0 0
    %404 = vmatpush1.bf16.msra.mxu0 %v332
    %405 = vmatprep.subr.bf16.mxu0 0
    %406 = vmatpush1.bf16.msra.mxu0 %v333
    %407 = vmatprep.subr.bf16.mxu0 0
    %408 = vmatpush1.bf16.msra.mxu0 %v334
    %409 = vmatprep.subr.bf16.mxu0 0
    %410 = vmatpush1.bf16.msra.mxu0 %v335
    %411 = vmatprep.subr.bf16.mxu0 0
    %412 = vmatpush1.bf16.msra.mxu0 %v336
    %413 = vmatprep.subr.bf16.mxu0 0
    %414 = vmatpush1.bf16.msra.mxu0 %v337
    %415 = vmatprep.subr.bf16.mxu0 0
    %416 = vmatpush1.bf16.msra.mxu0 %v338
    %417 = vmatprep.subr.bf16.mxu0 0
    %418 = vmatpush1.bf16.msra.mxu0 %v339
    %419 = vmatprep.subr.bf16.mxu0 0
    %420 = vmatpush1.bf16.msra.mxu0 %v340
    %421 = vmatprep.mubr.bf16.mxu0 %v190
    %422 = vmatmul.mubr.bf16.gmra.mrb[0].mxu0 %v189
    %v423 = vpop.f32.mrb[0].mxu0
    %v424 = vadd.f32 %v175, %v423
    %v425 = vpop.f32.mrb[0].mxu0
    %v426 = vpop.f32.mrb[0].mxu0
    %v427 = vadd.f32 %v175, %v426
    %v428 = vpop.f32.mrb[0].mxu0
    %429 = vdwg.mxu0
    %430 = vmatprep.subr.bf16.mxu0 0
    %431 = vmatpush1.bf16.msra.mxu0 %v341
    %432 = vmatprep.subr.bf16.mxu0 0
    %433 = vmatpush1.bf16.msra.mxu0 %v342
    %434 = vmatprep.subr.bf16.mxu0 0
    %435 = vmatpush1.bf16.msra.mxu0 %v343
    %436 = vmatprep.subr.bf16.mxu0 0
    %437 = vmatpush1.bf16.msra.mxu0 %v344
    %438 = vmatprep.subr.bf16.mxu0 0
    %439 = vmatpush1.bf16.msra.mxu0 %v345
    %440 = vmatprep.subr.bf16.mxu0 0
    %441 = vmatpush1.bf16.msra.mxu0 %v346
    %442 = vmatprep.subr.bf16.mxu0 0
    %443 = vmatpush1.bf16.msra.mxu0 %v347
    %444 = vmatprep.subr.bf16.mxu0 0
    %445 = vmatpush1.bf16.msra.mxu0 %v348
    %446 = vmatprep.subr.bf16.mxu0 0
    %447 = vmatpush1.bf16.msra.mxu0 %v349
    %448 = vmatprep.subr.bf16.mxu0 0
    %449 = vmatpush1.bf16.msra.mxu0 %v350
    %450 = vmatprep.subr.bf16.mxu0 0
    %451 = vmatpush1.bf16.msra.mxu0 %v351
    %452 = vmatprep.subr.bf16.mxu0 0
    %453 = vmatpush1.bf16.msra.mxu0 %v352
    %454 = vmatprep.subr.bf16.mxu0 0
    %455 = vmatpush1.bf16.msra.mxu0 %v353
    %456 = vmatprep.subr.bf16.mxu0 0
    %457 = vmatpush1.bf16.msra.mxu0 %v354
    %458 = vmatprep.subr.bf16.mxu0 0
    %459 = vmatpush1.bf16.msra.mxu0 %v355
    %460 = vmatprep.subr.bf16.mxu0 0
    %461 = vmatpush1.bf16.msra.mxu0 %v356
    %462 = vmatprep.mubr.bf16.mxu0 %v192
    %463 = vmatmul.mubr.bf16.gmra.mrb[0].mxu0 %v191
    %v464 = vpop.f32.mrb[0].mxu0
    %v465 = vadd.f32 %v424, %v464
    %v466 = vpop.f32.mrb[0].mxu0
    %v467 = vpop.f32.mrb[0].mxu0
    %v468 = vadd.f32 %v427, %v467
    %v469 = vpop.f32.mrb[0].mxu0
    %470 = vdwg.mxu0
    %v471 = vmax.f32 %v465, 0.0
    %v472 = vmax.f32 %v468, 0.0
    %v473 = vpack.c.bf16 %v472, %v471
    %v474 = vld [vmem:[#allocation7] sm:$0xf]
    %v475 = vld [vmem:[#allocation7 + $0x4] sm:$0xf]
    %v476 = vld [vmem:[#allocation7 + $0x8] sm:$0xf]
    %v477 = vld [vmem:[#allocation7 + $0xc] sm:$0xf]
    %v478 = vld [vmem:[#allocation7 + $0x10] sm:$0xf]
    %v479 = vld [vmem:[#allocation7 + $0x14] sm:$0xf]
    %v480 = vld [vmem:[#allocation7 + $0x18] sm:$0xf]
    %v481 = vld [vmem:[#allocation7 + $0x1c] sm:$0xf]
    %v482 = vld [vmem:[#allocation7 + $0x20] sm:$0xf]
    %v483 = vld [vmem:[#allocation7 + $0x24] sm:$0xf]
    %v484 = vld [vmem:[#allocation7 + $0x28] sm:$0xf]
    %v485 = vld [vmem:[#allocation7 + $0x2c] sm:$0xf]
    %v486 = vld [vmem:[#allocation7 + $0x30] sm:$0xf]
    %v487 = vld [vmem:[#allocation7 + $0x34] sm:$0xf]
    %v488 = vld [vmem:[#allocation7 + $0x38] sm:$0xf]
    %v489 = vld [vmem:[#allocation7 + $0x3c] sm:$0xf]
    %v490 = vld [vmem:[%s4] sm:$0x1]
    %v492 = vlaneseq
    %v493 = vshrl.u32 %v492, 7
    %v494 = vsub.s32 0, %v493
    %v495 = vrot.slane %v490, %v494
    %v513 = vunpack.c.l.b16 %v474
    %v514 = vunpack.c.l.b16 %v475
    %v515 = vunpack.c.l.b16 %v476
    %v516 = vunpack.c.l.b16 %v477
    %v517 = vunpack.c.l.b16 %v478
    %v518 = vunpack.c.l.b16 %v479
    %v519 = vunpack.c.l.b16 %v480
    %v520 = vunpack.c.l.b16 %v481
    %v521 = vunpack.c.l.b16 %v482
    %v522 = vunpack.c.l.b16 %v483
    %v523 = vunpack.c.l.b16 %v484
    %v524 = vunpack.c.l.b16 %v485
    %v525 = vunpack.c.l.b16 %v486
    %v526 = vunpack.c.l.b16 %v487
    %v527 = vunpack.c.l.b16 %v488
    %v528 = vunpack.c.l.b16 %v489
    %v529 = vpack.c.b16 %v514, %v513
    %v530 = vpack.c.b16 %v516, %v515
    %v531 = vpack.c.b16 %v518, %v517
    %v532 = vpack.c.b16 %v520, %v519
    %v533 = vpack.c.b16 %v522, %v521
    %v534 = vpack.c.b16 %v524, %v523
    %v535 = vpack.c.b16 %v526, %v525
    %v536 = vpack.c.b16 %v528, %v527
    %545 = vmatprep.subr.bf16.mxu0 0
    %546 = vmatpush1.bf16.msra.mxu0 %v529
    %547 = vmatprep.subr.bf16.mxu0 0
    %548 = vmatpush1.bf16.msra.mxu0 %v530
    %549 = vmatprep.subr.bf16.mxu0 0
    %550 = vmatpush1.bf16.msra.mxu0 %v531
    %551 = vmatprep.subr.bf16.mxu0 0
    %552 = vmatpush1.bf16.msra.mxu0 %v532
    %553 = vmatprep.subr.bf16.mxu0 0
    %554 = vmatpush1.bf16.msra.mxu0 %v533
    %555 = vmatprep.subr.bf16.mxu0 0
    %556 = vmatpush1.bf16.msra.mxu0 %v534
    %557 = vmatprep.subr.bf16.mxu0 0
    %558 = vmatpush1.bf16.msra.mxu0 %v535
    %559 = vmatprep.subr.bf16.mxu0 0
    %560 = vmatpush1.bf16.msra.mxu0 %v536
    %561 = vmatprep.subr.bf16.mxu0 0
    %562 = vmatpush1.bf16.msra.mxu0 0
    %563 = vmatprep.subr.bf16.mxu0 0
    %564 = vmatpush1.bf16.msra.mxu0 0
    %565 = vmatprep.subr.bf16.mxu0 0
    %566 = vmatpush1.bf16.msra.mxu0 0
    %567 = vmatprep.subr.bf16.mxu0 0
    %568 = vmatpush1.bf16.msra.mxu0 0
    %569 = vmatprep.subr.bf16.mxu0 0
    %570 = vmatpush1.bf16.msra.mxu0 0
    %571 = vmatprep.subr.bf16.mxu0 0
    %572 = vmatpush1.bf16.msra.mxu0 0
    %573 = vmatprep.subr.bf16.mxu0 0
    %574 = vmatpush1.bf16.msra.mxu0 0
    %575 = vmatprep.subr.bf16.mxu0 0
    %576 = vmatpush1.bf16.msra.mxu0 0
    %577 = vmatprep.mubr.bf16.mxu0 0
    %578 = vmatmul.mubr.bf16.gmra.mrb[0].mxu0 %v473
    %v579 = vpop.f32.mrb[0].mxu0
    %v580 = vadd.f32 %v495, %v579
    %v581 = vpop.f32.mrb[0].mxu0
    %v582 = vpop.f32.mrb[0].mxu0
    %v583 = vadd.f32 %v495, %v582
    %v584 = vpop.f32.mrb[0].mxu0
    %585 = vdwg.mxu0
    %v586 = vmax.f32 %v580, 0.0
    %v587 = vmax.f32 %v583, 0.0
    %v588 = vpack.c.bf16 %v587, %v586
    %v589 = vld [vmem:[#allocation8] sm:$0xf]
    %v590 = vld [vmem:[#allocation8 + $0x4] sm:$0xf]
    %v591 = vld [vmem:[#allocation8 + $0x8] sm:$0xf]
    %v592 = vld [vmem:[#allocation8 + $0xc] sm:$0xf]
    %v593 = vld [vmem:[#allocation8 + $0x10] sm:$0xf]
    %v594 = vld [vmem:[#allocation8 + $0x14] sm:$0xf]
    %v595 = vld [vmem:[#allocation8 + $0x18] sm:$0xf]
    %v596 = vld [vmem:[#allocation8 + $0x1c] sm:$0xf]
    %v597 = vld [vmem:[#allocation8 + $0x20] sm:$0xf]
    %v598 = vld [vmem:[#allocation8 + $0x24] sm:$0xf]
    %v599 = vld [vmem:[#allocation8 + $0x28] sm:$0xf]
    %v600 = vld [vmem:[#allocation8 + $0x2c] sm:$0xf]
    %v601 = vld [vmem:[#allocation8 + $0x30] sm:$0xf]
    %v602 = vld [vmem:[#allocation8 + $0x34] sm:$0xf]
    %v603 = vld [vmem:[#allocation8 + $0x38] sm:$0xf]
    %v604 = vld [vmem:[#allocation8 + $0x3c] sm:$0xf]
    %v605 = vld [vmem:[%s6] sm:$0x1]
    %v607 = vlaneseq
    %v608 = vshrl.u32 %v607, 7
    %v609 = vsub.s32 0, %v608
    %v610 = vrot.slane %v605, %v609
    %v628 = vunpack.c.l.b16 %v589
    %v629 = vunpack.c.l.b16 %v590
    %v630 = vunpack.c.l.b16 %v591
    %v631 = vunpack.c.l.b16 %v592
    %v632 = vunpack.c.l.b16 %v593
    %v633 = vunpack.c.l.b16 %v594
    %v634 = vunpack.c.l.b16 %v595
    %v635 = vunpack.c.l.b16 %v596
    %v636 = vunpack.c.l.b16 %v597
    %v637 = vunpack.c.l.b16 %v598
    %v638 = vunpack.c.l.b16 %v599
    %v639 = vunpack.c.l.b16 %v600
    %v640 = vunpack.c.l.b16 %v601
    %v641 = vunpack.c.l.b16 %v602
    %v642 = vunpack.c.l.b16 %v603
    %v643 = vunpack.c.l.b16 %v604
    %v644 = vpack.c.b16 %v629, %v628
    %v645 = vpack.c.b16 %v631, %v630
    %v646 = vpack.c.b16 %v633, %v632
    %v647 = vpack.c.b16 %v635, %v634
    %v648 = vpack.c.b16 %v637, %v636
    %v649 = vpack.c.b16 %v639, %v638
    %v650 = vpack.c.b16 %v641, %v640
    %v651 = vpack.c.b16 %v643, %v642
    %660 = vmatprep.subr.bf16.mxu0 0
    %661 = vmatpush1.bf16.msra.mxu0 %v644
    %662 = vmatprep.subr.bf16.mxu0 0
    %663 = vmatpush1.bf16.msra.mxu0 %v645
    %664 = vmatprep.subr.bf16.mxu0 0
    %665 = vmatpush1.bf16.msra.mxu0 %v646
    %666 = vmatprep.subr.bf16.mxu0 0
    %667 = vmatpush1.bf16.msra.mxu0 %v647
    %668 = vmatprep.subr.bf16.mxu0 0
    %669 = vmatpush1.bf16.msra.mxu0 %v648
    %670 = vmatprep.subr.bf16.mxu0 0
    %671 = vmatpush1.bf16.msra.mxu0 %v649
    %672 = vmatprep.subr.bf16.mxu0 0
    %673 = vmatpush1.bf16.msra.mxu0 %v650
    %674 = vmatprep.subr.bf16.mxu0 0
    %675 = vmatpush1.bf16.msra.mxu0 %v651
    %676 = vmatprep.subr.bf16.mxu0 0
    %677 = vmatpush1.bf16.msra.mxu0 0
    %678 = vmatprep.subr.bf16.mxu0 0
    %679 = vmatpush1.bf16.msra.mxu0 0
    %680 = vmatprep.subr.bf16.mxu0 0
    %681 = vmatpush1.bf16.msra.mxu0 0
    %682 = vmatprep.subr.bf16.mxu0 0
    %683 = vmatpush1.bf16.msra.mxu0 0
    %684 = vmatprep.subr.bf16.mxu0 0
    %685 = vmatpush1.bf16.msra.mxu0 0
    %686 = vmatprep.subr.bf16.mxu0 0
    %687 = vmatpush1.bf16.msra.mxu0 0
    %688 = vmatprep.subr.bf16.mxu0 0
    %689 = vmatpush1.bf16.msra.mxu0 0
    %690 = vmatprep.subr.bf16.mxu0 0
    %691 = vmatpush1.bf16.msra.mxu0 0
    %692 = vmatprep.mubr.bf16.mxu0 0
    %693 = vmatmul.mubr.bf16.gmra.mrb[0].mxu0 %v588
    %v694 = vpop.f32.mrb[0].mxu0
    %v695 = vadd.f32 %v610, %v694
    %v696 = vpop.f32.mrb[0].mxu0
    %v697 = vpop.f32.mrb[0].mxu0
    %v698 = vadd.f32 %v610, %v697
    %v699 = vpop.f32.mrb[0].mxu0
    %700 = vdwg.mxu0
    %v701 = vmax.f32 %v695, 0.0
    %v702 = vmax.f32 %v698, 0.0
    %v703 = vpack.c.bf16 %v702, %v701
    %v704 = vld [vmem:[#allocation10] sm:$0xff]
    %v705 = vld [vmem:[#allocation10 + $0x8] sm:$0xff]
    %v706 = vld [vmem:[#allocation10 + $0x10] sm:$0xff]
    %v707 = vld [vmem:[#allocation10 + $0x18] sm:$0xff]
    %v708 = vld [vmem:[#allocation10 + $0x20] sm:$0xff]
    %v709 = vld [vmem:[#allocation10 + $0x28] sm:$0xff]
    %v710 = vld [vmem:[#allocation10 + $0x30] sm:$0xff]
    %v711 = vld [vmem:[#allocation10 + $0x38] sm:$0xff]
    %v712 = vld [vmem:[#allocation10 + $0x40] sm:$0xff]
    %v713 = vld [vmem:[#allocation10 + $0x48] sm:$0xff]
    %v714 = vld [vmem:[#allocation10 + $0x50] sm:$0xff]
    %v715 = vld [vmem:[#allocation10 + $0x58] sm:$0xff]
    %v716 = vld [vmem:[#allocation10 + $0x60] sm:$0xff]
    %v717 = vld [vmem:[#allocation10 + $0x68] sm:$0xff]
    %v718 = vld [vmem:[#allocation10 + $0x70] sm:$0xff]
    %v719 = vld [vmem:[#allocation10 + $0x78] sm:$0xff]
    %v720 = vld [vmem:[#allocation10 + $0x80] sm:$0xff]
    %v721 = vld [vmem:[#allocation10 + $0x88] sm:$0xff]
    %v722 = vld [vmem:[#allocation10 + $0x90] sm:$0xff]
    %v723 = vld [vmem:[#allocation10 + $0x98] sm:$0xff]
    %v724 = vld [vmem:[#allocation10 + $0xa0] sm:$0xff]
    %v725 = vld [vmem:[#allocation10 + $0xa8] sm:$0xff]
    %v726 = vld [vmem:[#allocation10 + $0xb0] sm:$0xff]
    %v727 = vld [vmem:[#allocation10 + $0xb8] sm:$0xff]
    %v728 = vld [vmem:[#allocation10 + $0xc0] sm:$0xff]
    %v729 = vld [vmem:[#allocation10 + $0xc8] sm:$0xff]
    %v730 = vld [vmem:[#allocation10 + $0xd0] sm:$0xff]
    %v731 = vld [vmem:[#allocation10 + $0xd8] sm:$0xff]
    %v732 = vld [vmem:[#allocation10 + $0xe0] sm:$0xff]
    %v733 = vld [vmem:[#allocation10 + $0xe8] sm:$0xff]
    %v734 = vld [vmem:[#allocation10 + $0xf0] sm:$0xff]
    %v735 = vld [vmem:[#allocation10 + $0xf8] sm:$0xff]
    %v736 = vld [vmem:[%s8] sm:$0xf]
    %v738 = vlaneseq
    %v739 = vshrl.u32 %v738, 7
    %v740 = vsub.s32 0, %v739
    %v741 = vrot.slane %v736, %v740
    %v742 = vlaneseq
    %v743 = vshrl.u32 %v742, 7
    %v744 = vsub.s32 1, %v743
    %v745 = vrot.slane %v736, %v744
    %v746 = vlaneseq
    %v747 = vshrl.u32 %v746, 7
    %v748 = vsub.s32 2, %v747
    %v749 = vrot.slane %v736, %v748
    %v750 = vlaneseq
    %v751 = vshrl.u32 %v750, 7
    %v752 = vsub.s32 3, %v751
    %v753 = vrot.slane %v736, %v752
    %v790 = vunpack.c.l.b16 %v704
    %v791 = vunpack.c.h.b16 %v704
    %v792 = vunpack.c.l.b16 %v705
    %v793 = vunpack.c.h.b16 %v705
    %v794 = vunpack.c.l.b16 %v706
    %v795 = vunpack.c.h.b16 %v706
    %v796 = vunpack.c.l.b16 %v707
    %v797 = vunpack.c.h.b16 %v707
    %v798 = vunpack.c.l.b16 %v708
    %v799 = vunpack.c.h.b16 %v708
    %v800 = vunpack.c.l.b16 %v709
    %v801 = vunpack.c.h.b16 %v709
    %v802 = vunpack.c.l.b16 %v710
    %v803 = vunpack.c.h.b16 %v710
    %v804 = vunpack.c.l.b16 %v711
    %v805 = vunpack.c.h.b16 %v711
    %v806 = vunpack.c.l.b16 %v712
    %v807 = vunpack.c.h.b16 %v712
    %v808 = vunpack.c.l.b16 %v713
    %v809 = vunpack.c.h.b16 %v713
    %v810 = vunpack.c.l.b16 %v714
    %v811 = vunpack.c.h.b16 %v714
    %v812 = vunpack.c.l.b16 %v715
    %v813 = vunpack.c.h.b16 %v715
    %v814 = vunpack.c.l.b16 %v716
    %v815 = vunpack.c.h.b16 %v716
    %v816 = vunpack.c.l.b16 %v717
    %v817 = vunpack.c.h.b16 %v717
    %v818 = vunpack.c.l.b16 %v718
    %v819 = vunpack.c.h.b16 %v718
    %v820 = vunpack.c.l.b16 %v719
    %v821 = vunpack.c.h.b16 %v719
    %v822 = vunpack.c.l.b16 %v720
    %v823 = vunpack.c.h.b16 %v720
    %v824 = vunpack.c.l.b16 %v721
    %v825 = vunpack.c.h.b16 %v721
    %v826 = vunpack.c.l.b16 %v722
    %v827 = vunpack.c.h.b16 %v722
    %v828 = vunpack.c.l.b16 %v723
    %v829 = vunpack.c.h.b16 %v723
    %v830 = vunpack.c.l.b16 %v724
    %v831 = vunpack.c.h.b16 %v724
    %v832 = vunpack.c.l.b16 %v725
    %v833 = vunpack.c.h.b16 %v725
    %v834 = vunpack.c.l.b16 %v726
    %v835 = vunpack.c.h.b16 %v726
    %v836 = vunpack.c.l.b16 %v727
    %v837 = vunpack.c.h.b16 %v727
    %v838 = vunpack.c.l.b16 %v728
    %v839 = vunpack.c.h.b16 %v728
    %v840 = vunpack.c.l.b16 %v729
    %v841 = vunpack.c.h.b16 %v729
    %v842 = vunpack.c.l.b16 %v730
    %v843 = vunpack.c.h.b16 %v730
    %v844 = vunpack.c.l.b16 %v731
    %v845 = vunpack.c.h.b16 %v731
    %v846 = vunpack.c.l.b16 %v732
    %v847 = vunpack.c.h.b16 %v732
    %v848 = vunpack.c.l.b16 %v733
    %v849 = vunpack.c.h.b16 %v733
    %v850 = vunpack.c.l.b16 %v734
    %v851 = vunpack.c.h.b16 %v734
    %v852 = vunpack.c.l.b16 %v735
    %v853 = vunpack.c.h.b16 %v735
    %v854 = vpack.c.b16 %v794, %v790
    %v855 = vpack.c.b16 %v795, %v791
    %v856 = vpack.c.b16 %v796, %v792
    %v857 = vpack.c.b16 %v797, %v793
    %v858 = vpack.c.b16 %v802, %v798
    %v859 = vpack.c.b16 %v803, %v799
    %v860 = vpack.c.b16 %v804, %v800
    %v861 = vpack.c.b16 %v805, %v801
    %v862 = vpack.c.b16 %v810, %v806
    %v863 = vpack.c.b16 %v811, %v807
    %v864 = vpack.c.b16 %v812, %v808
    %v865 = vpack.c.b16 %v813, %v809
    %v866 = vpack.c.b16 %v818, %v814
    %v867 = vpack.c.b16 %v819, %v815
    %v868 = vpack.c.b16 %v820, %v816
    %v869 = vpack.c.b16 %v821, %v817
    %v870 = vpack.c.b16 %v826, %v822
    %v871 = vpack.c.b16 %v827, %v823
    %v872 = vpack.c.b16 %v828, %v824
    %v873 = vpack.c.b16 %v829, %v825
    %v874 = vpack.c.b16 %v834, %v830
    %v875 = vpack.c.b16 %v835, %v831
    %v876 = vpack.c.b16 %v836, %v832
    %v877 = vpack.c.b16 %v837, %v833
    %v878 = vpack.c.b16 %v842, %v838
    %v879 = vpack.c.b16 %v843, %v839
    %v880 = vpack.c.b16 %v844, %v840
    %v881 = vpack.c.b16 %v845, %v841
    %v882 = vpack.c.b16 %v850, %v846
    %v883 = vpack.c.b16 %v851, %v847
    %v884 = vpack.c.b16 %v852, %v848
    %v885 = vpack.c.b16 %v853, %v849
    %918 = vmatprep.subr.bf16.mxu0 %v855
    %919 = vmatpush1.bf16.msra.mxu0 %v854
    %920 = vmatprep.subr.bf16.mxu0 %v859
    %921 = vmatpush1.bf16.msra.mxu0 %v858
    %922 = vmatprep.subr.bf16.mxu0 %v863
    %923 = vmatpush1.bf16.msra.mxu0 %v862
    %924 = vmatprep.subr.bf16.mxu0 %v867
    %925 = vmatpush1.bf16.msra.mxu0 %v866
    %926 = vmatprep.subr.bf16.mxu0 %v871
    %927 = vmatpush1.bf16.msra.mxu0 %v870
    %928 = vmatprep.subr.bf16.mxu0 %v875
    %929 = vmatpush1.bf16.msra.mxu0 %v874
    %930 = vmatprep.subr.bf16.mxu0 %v879
    %931 = vmatpush1.bf16.msra.mxu0 %v878
    %932 = vmatprep.subr.bf16.mxu0 %v883
    %933 = vmatpush1.bf16.msra.mxu0 %v882
    %934 = vmatprep.subr.bf16.mxu0 0
    %935 = vmatpush1.bf16.msra.mxu0 0
    %936 = vmatprep.subr.bf16.mxu0 0
    %937 = vmatpush1.bf16.msra.mxu0 0
    %938 = vmatprep.subr.bf16.mxu0 0
    %939 = vmatpush1.bf16.msra.mxu0 0
    %940 = vmatprep.subr.bf16.mxu0 0
    %941 = vmatpush1.bf16.msra.mxu0 0
    %942 = vmatprep.subr.bf16.mxu0 0
    %943 = vmatpush1.bf16.msra.mxu0 0
    %944 = vmatprep.subr.bf16.mxu0 0
    %945 = vmatpush1.bf16.msra.mxu0 0
    %946 = vmatprep.subr.bf16.mxu0 0
    %947 = vmatpush1.bf16.msra.mxu0 0
    %948 = vmatprep.subr.bf16.mxu0 0
    %949 = vmatpush1.bf16.msra.mxu0 0
    %950 = vmatprep.mubr.bf16.mxu0 0
    %951 = vmatmul.mubr.bf16.gmra.mrb[0].mxu0 %v703
    %v952 = vpop.f32.mrb[0].mxu0
    %v953 = vadd.f32 %v741, %v952
    %v954 = vpop.f32.mrb[0].mxu0
    %v955 = vadd.f32 %v745, %v954
    %v956 = vpop.f32.mrb[0].mxu0
    %v957 = vadd.f32 %v741, %v956
    %v958 = vpop.f32.mrb[0].mxu0
    %v959 = vadd.f32 %v745, %v958
    %960 = vdwg.mxu0
    %961 = vmatprep.subr.bf16.mxu0 %v857
    %962 = vmatpush1.bf16.msra.mxu0 %v856
    %963 = vmatprep.subr.bf16.mxu0 %v861
    %964 = vmatpush1.bf16.msra.mxu0 %v860
    %965 = vmatprep.subr.bf16.mxu0 %v865
    %966 = vmatpush1.bf16.msra.mxu0 %v864
    %967 = vmatprep.subr.bf16.mxu0 %v869
    %968 = vmatpush1.bf16.msra.mxu0 %v868
    %969 = vmatprep.subr.bf16.mxu0 %v873
    %970 = vmatpush1.bf16.msra.mxu0 %v872
    %971 = vmatprep.subr.bf16.mxu0 %v877
    %972 = vmatpush1.bf16.msra.mxu0 %v876
    %973 = vmatprep.subr.bf16.mxu0 %v881
    %974 = vmatpush1.bf16.msra.mxu0 %v880
    %975 = vmatprep.subr.bf16.mxu0 %v885
    %976 = vmatpush1.bf16.msra.mxu0 %v884
    %977 = vmatprep.subr.bf16.mxu0 0
    %978 = vmatpush1.bf16.msra.mxu0 0
    %979 = vmatprep.subr.bf16.mxu0 0
    %980 = vmatpush1.bf16.msra.mxu0 0
    %981 = vmatprep.subr.bf16.mxu0 0
    %982 = vmatpush1.bf16.msra.mxu0 0
    %983 = vmatprep.subr.bf16.mxu0 0
    %984 = vmatpush1.bf16.msra.mxu0 0
    %985 = vmatprep.subr.bf16.mxu0 0
    %986 = vmatpush1.bf16.msra.mxu0 0
    %987 = vmatprep.subr.bf16.mxu0 0
    %988 = vmatpush1.bf16.msra.mxu0 0
    %989 = vmatprep.subr.bf16.mxu0 0
    %990 = vmatpush1.bf16.msra.mxu0 0
    %991 = vmatprep.subr.bf16.mxu0 0
    %992 = vmatpush1.bf16.msra.mxu0 0
    %993 = vmatprep.mubr.bf16.mxu0 0
    %994 = vmatmul.mubr.bf16.gmra.mrb[0].mxu0 %v703
    %v995 = vpop.f32.mrb[0].mxu0
    %v996 = vadd.f32 %v749, %v995
    %v997 = vpop.f32.mrb[0].mxu0
    %v998 = vadd.f32 %v753, %v997
    %v999 = vpop.f32.mrb[0].mxu0
    %v1000 = vadd.f32 %v749, %v999
    %v1001 = vpop.f32.mrb[0].mxu0
    %v1002 = vadd.f32 %v753, %v1001
    %1003 = vdwg.mxu0
    %v1004 = vxor.u32 %v953, 2147483648
    %v1005 = vxor.u32 %v955, 2147483648
    %v1006 = vxor.u32 %v996, 2147483648
    %v1007 = vxor.u32 %v998, 2147483648
    %v1008 = vxor.u32 %v957, 2147483648
    %v1009 = vxor.u32 %v959, 2147483648
    %v1010 = vxor.u32 %v1000, 2147483648
    %v1011 = vxor.u32 %v1002, 2147483648
    %v1012 = vmul.f32 %v1004, 1.442695
    %v1013 = vpow.pop %v1012
    %v1014 = vmul.f32 %v1005, 1.442695
    %v1015 = vpow.pop %v1014
    %v1016 = vmul.f32 %v1006, 1.442695
    %v1017 = vpow.pop %v1016
    %v1018 = vmul.f32 %v1007, 1.442695
    %v1019 = vpow.pop %v1018
    %v1020 = vmul.f32 %v1008, 1.442695
    %v1021 = vpow.pop %v1020
    %v1022 = vmul.f32 %v1009, 1.442695
    %v1023 = vpow.pop %v1022
    %v1024 = vmul.f32 %v1010, 1.442695
    %v1025 = vpow.pop %v1024
    %v1026 = vmul.f32 %v1011, 1.442695
    %v1027 = vpow.pop %v1026
    %v1028 = vadd.f32 %v1013, 1.0
    %v1029 = vadd.f32 %v1015, 1.0
    %v1030 = vadd.f32 %v1017, 1.0
    %v1031 = vadd.f32 %v1019, 1.0
    %v1032 = vadd.f32 %v1021, 1.0
    %v1033 = vadd.f32 %v1023, 1.0
    %v1034 = vadd.f32 %v1025, 1.0
    %v1035 = vadd.f32 %v1027, 1.0
    %v1036 = vrcp.pop %v1028
    %v1037 = vmul.f32 1.0, %v1036
    %v1038 = vrcp.pop %v1029
    %v1039 = vmul.f32 1.0, %v1038
    %v1040 = vrcp.pop %v1030
    %v1041 = vmul.f32 1.0, %v1040
    %v1042 = vrcp.pop %v1031
    %v1043 = vmul.f32 1.0, %v1042
    %v1044 = vrcp.pop %v1032
    %v1045 = vmul.f32 1.0, %v1044
    %v1046 = vrcp.pop %v1033
    %v1047 = vmul.f32 1.0, %v1046
    %v1048 = vrcp.pop %v1034
    %v1049 = vmul.f32 1.0, %v1048
    %v1050 = vrcp.pop %v1035
    %v1051 = vmul.f32 1.0, %v1050
    %v1052 = vmul.f32 %v1037, 4.0
    %v1053 = vmul.f32 %v1039, 4.0
    %v1054 = vmul.f32 %v1041, 4.0
    %v1055 = vmul.f32 %v1043, 4.0
    %v1056 = vmul.f32 %v1045, 4.0
    %v1057 = vmul.f32 %v1047, 4.0
    %v1058 = vmul.f32 %v1049, 4.0
    %v1059 = vmul.f32 %v1051, 4.0
    %v1060 = vadd.f32 %v1052, 1.0
    %v1061 = vadd.f32 %v1053, 1.0
    %v1062 = vadd.f32 %v1054, 1.0
    %v1063 = vadd.f32 %v1055, 1.0
    %v1064 = vadd.f32 %v1056, 1.0
    %v1065 = vadd.f32 %v1057, 1.0
    %v1066 = vadd.f32 %v1058, 1.0
    %v1067 = vadd.f32 %v1059, 1.0
    %1068 = vst [vmem:[#allocation11] sm:$0xff] %v1060
    %1069 = vst [vmem:[#allocation11 + $0x8] sm:$0xff] %v1061
    %1070 = vst [vmem:[#allocation11 + $0x10] sm:$0xff] %v1062
    %1071 = vst [vmem:[#allocation11 + $0x18] sm:$0xff] %v1063
    %1072 = vst [vmem:[#allocation11 + $0x20] sm:$0xff] %v1064
    %1073 = vst [vmem:[#allocation11 + $0x28] sm:$0xff] %v1065
    %1074 = vst [vmem:[#allocation11 + $0x30] sm:$0xff] %v1066
    %1075 = vst [vmem:[#allocation11 + $0x38] sm:$0xff] %v1067
    // Predicated region
    $region58: #{tpu_custom_call.1} parent=1 // pred_check
      _
    $region59: #{tpu_custom_call.1} parent=1 // pred_check_branch
      %1077 = sbr.rel (0) target = $region61
    $region60: #{tpu_custom_call.1} parent=1 // pred_region
      %s1079 = ssub.s32 1024, 1024
      %1080 = vsyncadd [#allocation4], %s1079
      %s1081 = sshll.u32 [#allocation11], 4
      %s1082 = int_to_ptr.vmem [resolvable:$true] %s1081
      %1087 = dma.vmem_to_hbm [thread:$0]  %s1082, 1024, %s9, [#allocation4], 512, 512, 32
    $region61: #{tpu_custom_call.1} parent=1 // pred_fallthru
      _
    // Predicated region
    $region62: #{tpu_custom_call.1} parent=1 // pred_check
      _
    $region63: #{tpu_custom_call.1} parent=1 // pred_check_branch
      %1089 = sbr.rel (0) target = $region65
    $region64: #{tpu_custom_call.1} parent=1 // pred_region
      %1090 = dma.done [#allocation4], 1024
    $region65: #{tpu_custom_call.1} parent=1 // pred_fallthru
      _
    %1091 = vsyncpa [#allocation3], 1
    %1092 = vsyncpa [#allocation6], 1
    %1093 = vsyncpa [#allocation9], 1
    %1094 = vsyncpa [#allocation4], 1

</llo_original>
